<compile_context>
chip_gen: v7x
topology: tpu7x:2x2x1
jax: 0.10.0
libtpu: 0.0.40
codegen_flags: <defaults>
</compile_context>

<pallas_src>
import math

import jax
import jax.numpy as jnp
from jax.experimental import pallas as pl
from jax.experimental.pallas import tpu as pltpu


def _copy_kernel(x_ref, o_ref):
    # Identity copy of the current (block_rows, lanes) tile.
    o_ref[...] = x_ref[...]


_TARGET_TILE_BYTES = 4 * 1024 * 1024   # per block; x2 operands x2 buffers ≈ 16 MiB
_MAX_LANES = 2048                      # lane-dense: large multiple of 128


def _pick_layout(total, itemsize):
    """Pick a lane-dense (rows, lanes) layout and a row-block size.

    Returns (rows, lanes, block_rows) with rows % block_rows == 0, or None if
    `total` is not a multiple of 128 (fallback to a single full-extent block).
    """
    lanes = 0
    for cand in (_MAX_LANES, 1024, 512, 256, 128):
        if total % cand == 0:
            lanes = cand
            break
    if lanes == 0:
        return None
    rows = total // lanes

    if rows % 8 != 0:
        # Full-extent rows block (legal even when not a multiple of 8).
        # Only hit for small/odd sizes; large slabs always hit the branch below.
        return rows, lanes, rows

    # Largest power-of-two multiple of 8 that divides rows and keeps the tile
    # near the ~4 MiB target (amortizes the ~600-cycle per-grid-step overhead
    # while staying well inside scoped VMEM on every generation incl. v7x).
    target_rows = max(8, _TARGET_TILE_BYTES // (lanes * itemsize))
    block_rows = 8
    d = 8
    while d <= min(rows, target_rows):
        if rows % d == 0:
            block_rows = d
        d *= 2
    return rows, lanes, block_rows


def _pallas_materialize_copy(x):
    """Stream x through VMEM to produce a materialized contiguous buffer.

    Lane-dense tiling: the whole tensor is viewed as (rows, lanes) with lanes a
    large multiple of 128 (unmasked vst) and rows tiled in multiples of 8.
    Output aliases the (fresh, reshaped) input buffer, so no extra HBM
    allocation is made.
    """
    total = math.prod(x.shape) if x.shape else 1
    itemsize = jnp.dtype(x.dtype).itemsize

    layout = _pick_layout(total, itemsize)
    if layout is None:
        # total not a multiple of 128: single full-extent block (masked stores,
        # but this only happens for tiny/odd shapes).
        rows, lanes, block_rows = 1, total, 1
    else:
        rows, lanes, block_rows = layout

    x2d = x.reshape(rows, lanes)            # metadata only
    grid = (rows // block_rows,)            # exact division by construction

    y2d = pl.pallas_call(
        _copy_kernel,
        out_shape=jax.ShapeDtypeStruct((rows, lanes), x.dtype),
        grid=grid,
        in_specs=[pl.BlockSpec((block_rows, lanes), lambda i: (i, 0))],
        out_specs=pl.BlockSpec((block_rows, lanes), lambda i: (i, 0)),
        # Write back in place: no second HBM buffer, halves peak footprint.
        input_output_aliases={0: 0},
        compiler_params=pltpu.CompilerParams(
            # "parallel": megacore / v7x two-TC split of the streaming copy.
            dimension_semantics=("parallel",),
            vmem_limit_bytes=48 * 1024 * 1024,
        ),
    )(x2d)
    return y2d


class Reshape:
    """JAX/Pallas equivalent of MuseGAN's Reshape(nn.Module).

    forward(x) = x.view(x.size(0), *shape).  By default this is a zero-cost
    metadata reshape (no kernel, no HBM traffic).  Pass materialize=True to
    force a fresh contiguous buffer via the lane-dense Pallas streaming copy.
    """

    def __init__(self, shape):
        self.shape = tuple(shape)

    def __call__(self, x, *, materialize=False):
        batch = x.shape[0]
        rest = math.prod(x.shape[1:])
        target_rest = math.prod(self.shape)
        assert rest == target_rest, (
            f"cannot view {x.shape} as ({batch}, *{self.shape})"
        )
        out_shape = (batch,) + self.shape
        if not materialize:
            # Pure .view semantics: metadata-only, emit no kernel.
            return x.reshape(out_shape)
        # Optional materialized path: element copy runs in the Pallas kernel,
        # final shape change is metadata only.
        y = _pallas_materialize_copy(x)
        return y.reshape(out_shape)


if __name__ == "__main__":
    key = jax.random.PRNGKey(0)
    # Small MuseGAN-style feature map: NCHW input.
    B, C, H, W = 2, 4, 16, 16          # 4*16*16 = 1024 elements per example
    x = jax.random.normal(key, (B, C, H, W), dtype=jnp.float32)

    # Reshape((64, 16)) : view (2, 4, 16, 16) -> (2, 64, 16)
    module = Reshape((64, 16))
    ref = x.reshape(B, 64, 16)

    # Default path: metadata-only (the recommended, zero-cost route).
    y0 = jax.block_until_ready(module(x))
    assert y0.shape == (B, 64, 16)
    assert y0.dtype == x.dtype
    assert bool(jnp.all(y0 == ref))

    # Materialized path: runs the Pallas streaming-copy kernel once.
    y1 = jax.block_until_ready(module(x, materialize=True))
    assert y1.shape == (B, 64, 16)
    assert y1.dtype == x.dtype
    assert bool(jnp.all(y1 == ref))

    print("KERNEL_OK")
</pallas_src>

<mosaic_0001>
module attributes {stable_mosaic.version = 11 : i64} {
  func.func @_copy_kernel(%arg0: i32, %arg1: memref<1x2048xf32, #tpu.memory_space<vmem>>, %arg2: memref<1x2048xf32, #tpu.memory_space<vmem>>) attributes {dimension_semantics = [#tpu.dimension_semantics<parallel>], iteration_bounds = array<i64: 1>, scalar_prefetch = 0 : i64, scratch_operands = 0 : i64, tpu.core_type = #tpu.core_type<tc>, window_params = [{transform_indices = @transform_0, window_bounds = array<i64: 1, 2048>}, {transform_indices = @transform_1, window_bounds = array<i64: 1, 2048>}]} {
    %c0 = arith.constant 0 : index
    %c0_0 = arith.constant 0 : index
    %0 = vector.load %arg1[%c0, %c0_0] : memref<1x2048xf32, #tpu.memory_space<vmem>>, vector<1x2048xf32>
    %c0_1 = arith.constant 0 : index
    %c0_2 = arith.constant 0 : index
    %1 = vector.load %arg2[%c0_1, %c0_2] : memref<1x2048xf32, #tpu.memory_space<vmem>>, vector<1x2048xf32>
    tpu.vector_store %arg2[%c0_1, %c0_2], %0 {strides = array<i32>} : memref<1x2048xf32, #tpu.memory_space<vmem>>, vector<1x2048xf32>,
    return
  }
  func.func @transform_0(%arg0: i32) -> (i32, i32) {
    %c0_i32 = arith.constant 0 : i32
    %c0_i32_0 = arith.constant 0 : i32
    return %arg0, %c0_i32 : i32, i32
  }
  func.func @transform_1(%arg0: i32) -> (i32, i32) {
    %c0_i32 = arith.constant 0 : i32
    %c0_i32_0 = arith.constant 0 : i32
    return %arg0, %c0_i32 : i32, i32
  }
}

</mosaic_0001>

<llo_original>
// kernel: tpu_custom_call.1
$region0: #{tpu_custom_call.1}
  #allocation0 [shape = 'u32[]', space=smem, size = 0x4, offset = 0x4, fixed_abs, tag = 'smem constant byte address 0x4 - core index']
  #allocation1 [shape = 'u32[144,128]{1,0:T(1,128)}', space=vmem, size = 0x12000, scoped, tag = 'internal scratch']
  %s0 = inlined_call_operand.hbm [shape: f32[1,2048], index: 0, kind: input, shape index: {}, may-alias: {0,1}]
  %s1 = inlined_call_operand.hbm [shape: f32[1,2048], index: 1, kind: output, shape index: {}, may-alias: {0,1}]
  %s2 = sld [smem:[#allocation0]]
  $region18: #{tpu_custom_call.1} parent=0
    _
  %s4 = ssub.s32 1, %s2
  %s5 = scalar_select 0, %s4, %s2
  $region1: #{tpu_custom_call.1} parent=0
    #allocation2 [shape = 'u8[8192]{0}', space=vmem, size = 0x2000, scoped, tag = 'input window, operand 0, single buffered']
    #allocation3 [shape = 's32[1]{0}', space=sflag, size = 0x4, scoped, tag = 'scoped memory for tpu_custom_call.1']
    #allocation4 [shape = 's32[1]{0}', space=sflag, size = 0x4, scoped, tag = 'scoped memory for tpu_custom_call.1']
    #allocation5 [shape = 'u8[8192]{0}', space=vmem, size = 0x2000, scoped, tag = 'output window, operand 0, single buffered']
    %6 = vsyncpa [#allocation3], 0
    %7 = vsyncpa [#allocation4], 0
    // Predicated region
    $region2: #{tpu_custom_call.1} parent=1 // pred_check
      _
    $region3: #{tpu_custom_call.1} parent=1 // pred_check_branch
      %9 = sbr.rel (0) target = $region5
    $region4: #{tpu_custom_call.1} parent=1 // pred_region
      %s11 = ssub.s32 256, 256
      %12 = vsyncadd [#allocation3], %s11
      %s14 = sshll.u32 [#allocation2], 4
      %s15 = int_to_ptr.vmem [resolvable:$true] %s14
      %17 = dma.hbm_to_vmem [thread:$0]  %s0, 256, %s15, [#allocation3]
    $region5: #{tpu_custom_call.1} parent=1 // pred_fallthru
      _
    // Predicated region
    $region6: #{tpu_custom_call.1} parent=1 // pred_check
      _
    $region7: #{tpu_custom_call.1} parent=1 // pred_check_branch
      %19 = sbr.rel (0) target = $region9
    $region8: #{tpu_custom_call.1} parent=1 // pred_region
      %20 = dma.done [#allocation3], 256
    $region9: #{tpu_custom_call.1} parent=1 // pred_fallthru
      _
    %v21 = vld [vmem:[#allocation2] sm:$0xff]
    %v22 = vld [vmem:[#allocation2 + $0x8] sm:$0xff]
    %23 = vst [vmem:[#allocation5] sm:$0xff] %v21
    %24 = vst [vmem:[#allocation5 + $0x8] sm:$0xff] %v22
    // Predicated region
    $region10: #{tpu_custom_call.1} parent=1 // pred_check
      _
    $region11: #{tpu_custom_call.1} parent=1 // pred_check_branch
      %26 = sbr.rel (0) target = $region13
    $region12: #{tpu_custom_call.1} parent=1 // pred_region
      %s28 = ssub.s32 256, 256
      %29 = vsyncadd [#allocation4], %s28
      %s31 = sshll.u32 [#allocation5], 4
      %s32 = int_to_ptr.vmem [resolvable:$true] %s31
      %34 = dma.vmem_to_hbm [thread:$0]  %s32, 256, %s1, [#allocation4]
    $region13: #{tpu_custom_call.1} parent=1 // pred_fallthru
      _
    // Predicated region
    $region14: #{tpu_custom_call.1} parent=1 // pred_check
      _
    $region15: #{tpu_custom_call.1} parent=1 // pred_check_branch
      %36 = sbr.rel (0) target = $region17
    $region16: #{tpu_custom_call.1} parent=1 // pred_region
      %37 = dma.done [#allocation4], 256
    $region17: #{tpu_custom_call.1} parent=1 // pred_fallthru
      _
    %38 = vsyncpa [#allocation3], 1
    %39 = vsyncpa [#allocation4], 1

</llo_original>
